<compile_context>
chip_gen: v6e
topology: v6e:2x2x1
jax: 0.10.0
libtpu: 0.0.40
codegen_flags: <defaults>
</compile_context>

<pallas_src>
import jax
import jax.numpy as jnp
from jax.experimental import pallas as pl
from jax.experimental.pallas import tpu as pltpu

_LANE = 128          # vreg lane width
_NEG_SLOPE = 0.2     # LeakyReLU slope from the PyTorch module


def _round_up(n, m):
    return ((n + m - 1) // m) * m


def _sublane(dtype):
    # rows per vreg tile for this dtype (f32: 8, bf16: 16, int8/fp8: 32)
    return max(8, 32 // jnp.dtype(dtype).itemsize)


def _vmem_budget_bytes():
    """~75% of physical per-core VMEM (leaves headroom for Mosaic scratch):
    ≈96 MiB on 128 MiB v5e/v6e, ≈48 MiB on 64 MiB v7x."""
    cap = 64 * 1024 * 1024
    try:
        info = pltpu.get_tpu_info()
        cap = int(getattr(info, "vmem_capacity_bytes", cap))
    except Exception:
        pass
    return (cap * 3) // 4


# ----------------------------------------------------------------------------
# Kernels (one batch tile of TM rows; weights/biases are resident VMEM blocks).
# ----------------------------------------------------------------------------
def _folded_kernel(x_ref, w_ref, b_ref, o_ref):
    # out = LeakyReLU(x @ W_eff + b_eff);  W_eff/b_eff folded offline.
    x = x_ref[...].astype(w_ref.dtype)                        # cast in-kernel (VPU)
    out = jnp.dot(x, w_ref[...], preferred_element_type=jnp.float32)
    out = out + b_ref[...]                                    # f32 bias add
    o_ref[...] = jnp.where(out >= 0, out, _NEG_SLOPE * out).astype(o_ref.dtype)


def _two_layer_kernel(x_ref, w1_ref, b1_ref, w2_ref, b2_ref, o_ref):
    # hidden = x @ W1^T + b1 ; out = LeakyReLU(hidden @ W2^T + b2)
    x = x_ref[...].astype(w1_ref.dtype)
    h = jnp.dot(x, w1_ref[...], preferred_element_type=jnp.float32)
    h = h + b1_ref[...]
    out = jnp.dot(h.astype(w2_ref.dtype), w2_ref[...],
                  preferred_element_type=jnp.float32)
    out = out + b2_ref[...]
    o_ref[...] = jnp.where(out >= 0, out, _NEG_SLOPE * out).astype(o_ref.dtype)


# ----------------------------------------------------------------------------
# One-time parameter preparation (keep OUT of the per-call hot path).
# ----------------------------------------------------------------------------
def prepare_stock_mlp_params(w1, b1, w2, b2, compute_dtype=jnp.bfloat16):
    """w1: (hidden, in), b1: (hidden,), w2: (out, hidden), b2: (out,)  (PyTorch).

    Folds the two activation-free Linears into one (in, out) weight when that
    reduces work; only the lane dims (hidden/out) are zero-padded to 128 —
    the x/K dim stays unpadded so the wrapper never copies activations."""
    hidden, in_size = w1.shape
    out_size = w2.shape[0]
    out_pad = out_size if out_size % _LANE == 0 else _round_up(out_size, _LANE)
    hi = jax.lax.Precision.HIGHEST   # offline fold: full precision, one-time cost

    fold = in_size * out_size <= in_size * hidden + hidden * out_size
    params = {"in_size": in_size, "out_size": out_size, "out_pad": out_pad,
              "folded": fold, "compute_dtype": jnp.dtype(compute_dtype)}

    if fold:
        w_eff = jnp.dot(w1.astype(jnp.float32).T, w2.astype(jnp.float32).T,
                        precision=hi)                                   # (in, out)
        b_eff = jnp.dot(b1.astype(jnp.float32), w2.astype(jnp.float32).T,
                        precision=hi) + b2.astype(jnp.float32)          # (out,)
        w_p = jnp.zeros((in_size, out_pad), compute_dtype)
        w_p = w_p.at[:, :out_size].set(w_eff.astype(compute_dtype))
        b_p = jnp.zeros((1, out_pad), jnp.float32).at[:, :out_size].set(b_eff[None, :])
        params.update(w_eff=w_p, b_eff=b_p)
    else:
        hid_pad = _round_up(hidden, _LANE)
        w1_t = jnp.zeros((in_size, hid_pad), compute_dtype)
        w1_t = w1_t.at[:, :hidden].set(w1.T.astype(compute_dtype))
        w2_t = jnp.zeros((hid_pad, out_pad), compute_dtype)
        w2_t = w2_t.at[:hidden, :out_size].set(w2.T.astype(compute_dtype))
        b1_p = jnp.zeros((1, hid_pad), jnp.float32).at[:, :hidden].set(
            b1.astype(jnp.float32)[None, :])
        b2_p = jnp.zeros((1, out_pad), jnp.float32).at[:, :out_size].set(
            b2.astype(jnp.float32)[None, :])
        params.update(w1_t=w1_t, b1=b1_p, w2_t=w2_t, b2=b2_p, hid_pad=hid_pad)
    return params


# ----------------------------------------------------------------------------
# Forward pass on prepared params.
# ----------------------------------------------------------------------------
def stock_mlp_apply(x, params, block_rows=1024):
    B = x.shape[0]
    x2d = x.reshape(B, -1)                       # torch.reshape(x, (B, -1))
    in_size = params["in_size"]
    out_size = params["out_size"]
    out_pad = params["out_pad"]
    assert x2d.shape[1] == in_size, "input_size mismatch"

    x_item = jnp.dtype(x2d.dtype).itemsize
    sub = _sublane(x2d.dtype)

    # Batch tile: aim for >=2 grid steps (so v7x's 2 TCs both get work via the
    # "parallel" axis), keep each step >=128 rows, <= block_rows, and never
    # larger than the sublane-rounded batch. Partial last block is masked.
    tm = min(max(128, -(-B // 2)), max(block_rows, sub))
    tm = _round_up(tm, sub)
    tm = min(tm, _round_up(B, sub))
    grid = (pl.cdiv(B, tm),)

    # Resident (never-refetched) blocks: constant index_map + single buffer.
    def resident(shape):
        return pl.BlockSpec(shape, lambda i: (0,) * len(shape),
                            pipeline_mode=pl.Buffered(1))

    if params["folded"]:
        kernel = _folded_kernel
        w, b = params["w_eff"], params["b_eff"]
        in_specs = [
            pl.BlockSpec((tm, in_size), lambda i: (i, 0)),   # x tile (unpadded K)
            resident((in_size, out_pad)),                    # W_eff
            resident((1, out_pad)),                          # b_eff
        ]
        operands = (x2d, w, b)
        weight_bytes = w.size * jnp.dtype(w.dtype).itemsize + b.size * 4
        flops = 2 * B * in_size * out_pad
    else:
        kernel = _two_layer_kernel
        hid_pad = params["hid_pad"]
        w1_t, b1, w2_t, b2 = params["w1_t"], params["b1"], params["w2_t"], params["b2"]
        in_specs = [
            pl.BlockSpec((tm, in_size), lambda i: (i, 0)),   # x tile (unpadded K)
            resident((in_size, hid_pad)),                    # W1^T
            resident((1, hid_pad)),                          # b1
            resident((hid_pad, out_pad)),                    # W2^T
            resident((1, out_pad)),                          # b2
        ]
        operands = (x2d, w1_t, b1, w2_t, b2)
        weight_bytes = ((w1_t.size + w2_t.size) * jnp.dtype(w1_t.dtype).itemsize
                        + (b1.size + b2.size) * 4)
        flops = 2 * B * (in_size * hid_pad + hid_pad * out_pad)

    # Scheduler hint (unpadded x traffic, lane-padded output traffic).
    cost = pl.CostEstimate(
        flops=int(flops), transcendentals=0,
        bytes_accessed=int(B * in_size * x_item + weight_bytes
                           + B * out_pad * x_item))

    # VMEM budget: double-buffered x/out tiles + single-buffered resident
    # weights, 2x headroom, capped by a generation-aware ceiling.
    vmem_bytes = (2 * tm * in_size * x_item
                  + 2 * tm * out_pad * x_item
                  + weight_bytes)
    vmem_limit = int(min(_vmem_budget_bytes(),
                         max(4 * 1024 * 1024, 2 * vmem_bytes)))

    out = pl.pallas_call(
        kernel,
        out_shape=jax.ShapeDtypeStruct((B, out_pad), x.dtype),
        grid_spec=pltpu.PrefetchScalarGridSpec(
            num_scalar_prefetch=0,
            grid=grid,
            in_specs=in_specs,
            out_specs=pl.BlockSpec((tm, out_pad), lambda i: (i, 0)),
        ),
        compiler_params=pltpu.CompilerParams(
            dimension_semantics=("parallel",),   # shard batch tiles across TCs (v7x)
            vmem_limit_bytes=vmem_limit,
        ),
        cost_estimate=cost,
    )(*operands)

    # Only slice lanes when out_size < lane width (keeps stores lane-dense);
    # no row slice needed since the output has exactly B rows.
    if out_pad != out_size:
        out = out[:, :out_size]
    return out


def stock_mlp(x, w1, b1, w2, b2, block_rows=1024, compute_dtype=jnp.bfloat16):
    """Convenience wrapper: prepare params (ideally done once and reused) + apply."""
    params = prepare_stock_mlp_params(w1, b1, w2, b2, compute_dtype)
    return stock_mlp_apply(x, params, block_rows=block_rows)


def stock_mlp_ref(x, w1, b1, w2, b2):
    """Pure-JAX reference matching the PyTorch forward."""
    hi = jax.lax.Precision.HIGHEST
    x2d = x.reshape(x.shape[0], -1)
    hid = jnp.dot(x2d, w1.T, precision=hi) + b1
    out = jnp.dot(hid, w2.T, precision=hi) + b2
    return jnp.where(out >= 0, out, _NEG_SLOPE * out)


def _uniform(key, shape, bound):
    return jax.random.uniform(key, shape, jnp.float32, -bound, bound)


if __name__ == "__main__":
    # Shapes implied by the module: x (batch, seq, feat) flattened to input_size.
    batch, seq, feat = 2, 8, 4
    input_size = seq * feat          # 32
    hidden_size = 32
    output_size = 8

    key = jax.random.PRNGKey(0)
    keys = jax.random.split(key, 10)
    kx, kw1, kb1, kw2, kb2, kx2, kw3, kb3, kw4, kb4 = keys

    x = jax.random.normal(kx, (batch, seq, feat), dtype=jnp.float32)
    s1 = 1.0 / jnp.sqrt(input_size)
    s2 = 1.0 / jnp.sqrt(hidden_size)
    w1 = _uniform(kw1, (hidden_size, input_size), s1)
    b1 = _uniform(kb1, (hidden_size,), s1)
    w2 = _uniform(kw2, (output_size, hidden_size), s2)
    b2 = _uniform(kb2, (output_size,), s2)

    ref_small = stock_mlp_ref(x, w1, b1, w2, b2)

    # --- Test 1: f32 compute, folded path, tiny batch (single grid step). ---
    params_f32 = prepare_stock_mlp_params(w1, b1, w2, b2, compute_dtype=jnp.float32)
    assert params_f32["folded"]
    out = jax.block_until_ready(stock_mlp_apply(x, params_f32))
    assert out.shape == (batch, output_size)
    assert jnp.allclose(out, ref_small, atol=1e-4, rtol=1e-4)

    # --- Test 2: f32, larger batch -> >=2 grid steps with a masked partial block. ---
    big_batch = 300
    xb = jax.random.normal(kx2, (big_batch, seq, feat), dtype=jnp.float32)
    ref_big = stock_mlp_ref(xb, w1, b1, w2, b2)
    out_b = jax.block_until_ready(stock_mlp_apply(xb, params_f32))
    assert out_b.shape == (big_batch, output_size)
    assert jnp.allclose(out_b, ref_big, atol=1e-4, rtol=1e-4)

    # --- Test 3: default bf16 weights on the hot path (relaxed tolerance). ---
    params_bf16 = prepare_stock_mlp_params(w1, b1, w2, b2)   # bf16 default
    out_bf = jax.block_until_ready(stock_mlp_apply(xb, params_bf16))
    assert out_bf.shape == (big_batch, output_size)
    assert jnp.allclose(out_bf, ref_big, atol=5e-2, rtol=5e-2)

    # --- Test 4: un-folded two-dot path (folding would inflate the weight). ---
    hid4, out4 = 8, 64
    s3 = 1.0 / jnp.sqrt(input_size)
    s4 = 1.0 / jnp.sqrt(hid4)
    w3 = _uniform(kw3, (hid4, input_size), s3)
    b3 = _uniform(kb3, (hid4,), s3)
    w4 = _uniform(kw4, (out4, hid4), s4)
    b4 = _uniform(kb4, (out4,), s4)
    params_2dot = prepare_stock_mlp_params(w3, b3, w4, b4, compute_dtype=jnp.float32)
    assert not params_2dot["folded"]
    x17 = xb[:17]
    out_2 = jax.block_until_ready(stock_mlp_apply(x17, params_2dot))
    ref_2 = stock_mlp_ref(x17, w3, b3, w4, b4)
    assert out_2.shape == (17, out4)
    assert jnp.allclose(out_2, ref_2, atol=1e-4, rtol=1e-4)

    print("KERNEL_OK")
</pallas_src>

<mosaic_0001>
module attributes {stable_mosaic.version = 11 : i64} {
  func.func @_folded_kernel(%arg0: i32, %arg1: memref<8x32xf32, #tpu.memory_space<vmem>>, %arg2: memref<32x128xf32, #tpu.memory_space<vmem>>, %arg3: memref<1x128xf32, #tpu.memory_space<vmem>>, %arg4: memref<8x128xf32, #tpu.memory_space<vmem>>) attributes {dimension_semantics = [#tpu.dimension_semantics<parallel>], iteration_bounds = array<i64: 1>, scalar_prefetch = 0 : i64, scratch_operands = 0 : i64, tpu.core_type = #tpu.core_type<tc>, window_params = [{transform_indices = @transform_0, window_bounds = array<i64: 8, 32>}, {pipeline_mode = #tpu.pipeline_mode<synchronous>, transform_indices = @transform_1, window_bounds = array<i64: 32, 128>}, {pipeline_mode = #tpu.pipeline_mode<synchronous>, transform_indices = @transform_2, window_bounds = array<i64: 1, 128>}, {transform_indices = @transform_3, window_bounds = array<i64: 8, 128>}]} {
    %c0 = arith.constant 0 : index
    %c0_0 = arith.constant 0 : index
    %0 = vector.load %arg1[%c0, %c0_0] : memref<8x32xf32, #tpu.memory_space<vmem>>, vector<8x32xf32>
    %c0_1 = arith.constant 0 : index
    %c0_2 = arith.constant 0 : index
    %1 = vector.load %arg2[%c0_1, %c0_2] : memref<32x128xf32, #tpu.memory_space<vmem>>, vector<32x128xf32>
    %cst = arith.constant dense<0.000000e+00> : vector<8x128xf32>
    %2 = tpu.matmul %0, %1, %cst {dimension_numbers = #tpu.dot_dimension_numbers<[1], [0], [0], [1], [0, 0, 1, 1], [], []>} : vector<8x32xf32>, vector<32x128xf32>, vector<8x128xf32> -> vector<8x128xf32>
    %c0_3 = arith.constant 0 : index
    %c0_4 = arith.constant 0 : index
    %3 = vector.load %arg3[%c0_3, %c0_4] : memref<1x128xf32, #tpu.memory_space<vmem>>, vector<1x128xf32>
    %4 = vector.broadcast %3 : vector<1x128xf32> to vector<8x128xf32>
    %5 = arith.addf %2, %4 : vector<8x128xf32>
    %cst_5 = arith.constant 0.000000e+00 : f32
    %6 = vector.broadcast %cst_5 : f32 to vector<8x128xf32>
    %7 = arith.cmpf oge, %5, %6 : vector<8x128xf32>
    %cst_6 = arith.constant 2.000000e-01 : f32
    %8 = vector.broadcast %cst_6 : f32 to vector<8x128xf32>
    %9 = arith.mulf %8, %5 : vector<8x128xf32>
    %10 = arith.select %7, %5, %9 : vector<8x128xi1>, vector<8x128xf32>
    %c0_7 = arith.constant 0 : index
    %c0_8 = arith.constant 0 : index
    %11 = vector.load %arg4[%c0_7, %c0_8] : memref<8x128xf32, #tpu.memory_space<vmem>>, vector<8x128xf32>
    tpu.vector_store %arg4[%c0_7, %c0_8], %10 {strides = array<i32>} : memref<8x128xf32, #tpu.memory_space<vmem>>, vector<8x128xf32>,
    return
  }
  func.func @transform_0(%arg0: i32) -> (i32, i32) {
    %c0_i32 = arith.constant 0 : i32
    %c0_i32_0 = arith.constant 0 : i32
    return %arg0, %c0_i32 : i32, i32
  }
  func.func @transform_1(%arg0: i32) -> (i32, i32) {
    %c0_i32 = arith.constant 0 : i32
    %c0_i32_0 = arith.constant 0 : i32
    %c0_i32_1 = arith.constant 0 : i32
    return %c0_i32, %c0_i32_0 : i32, i32
  }
  func.func @transform_2(%arg0: i32) -> (i32, i32) {
    %c0_i32 = arith.constant 0 : i32
    %c0_i32_0 = arith.constant 0 : i32
    %c0_i32_1 = arith.constant 0 : i32
    return %c0_i32, %c0_i32_0 : i32, i32
  }
  func.func @transform_3(%arg0: i32) -> (i32, i32) {
    %c0_i32 = arith.constant 0 : i32
    %c0_i32_0 = arith.constant 0 : i32
    return %arg0, %c0_i32 : i32, i32
  }
}

</mosaic_0001>

<llo_original>
// kernel: tpu_custom_call.1
$region0: #{tpu_custom_call.1}
  #allocation0 [shape = 'u32[]', space=smem, size = 0x4, offset = 0x4, fixed_abs, tag = 'smem constant byte address 0x4 - core index']
  #allocation1 [shape = 'u32[144,128]{1,0:T(1,128)}', space=vmem, size = 0x12000, scoped, tag = 'internal scratch']
  %s0 = inlined_call_operand.hbm [shape: f32[2,32], index: 0, kind: input, shape index: {}]
  %s1 = inlined_call_operand.hbm [shape: f32[32,128], index: 1, kind: input, shape index: {}]
  %s2 = inlined_call_operand.vmem [shape: f32[1,128], index: 2, kind: input, shape index: {}]
  %s3 = inlined_call_operand.hbm [shape: f32[2,128], index: 3, kind: output, shape index: {}]
  %s4 = sld [smem:[#allocation0]]
  $region30: #{tpu_custom_call.1} parent=0
    _
  %s6 = ssub.s32 1, %s4
  %s7 = scalar_select 0, %s6, %s4
  $region1: #{tpu_custom_call.1} parent=0
    #allocation2 [shape = 'u8[4096]{0}', space=vmem, size = 0x1000, scoped, tag = 'input window, operand 0, single buffered']
    #allocation3 [shape = 's32[1]{0}', space=sflag, size = 0x4, scoped, tag = 'scoped memory for tpu_custom_call.1']
    #allocation4 [shape = 's32[1]{0}', space=sflag, size = 0x4, scoped, tag = 'scoped memory for tpu_custom_call.1']
    #allocation5 [shape = 'u8[16384]{0}', space=vmem, size = 0x4000, scoped, tag = 'input window, operand 1, single buffered']
    #allocation6 [shape = 's32[1]{0}', space=sflag, size = 0x4, scoped, tag = 'scoped memory for tpu_custom_call.1']
    #allocation7 [shape = 'u8[4096]{0}', space=vmem, size = 0x1000, scoped, tag = 'output window, operand 0, single buffered']
    %8 = vsyncpa [#allocation3], 0
    %9 = vsyncpa [#allocation6], 0
    %10 = vsyncpa [#allocation4], 0
    // Predicated region
    $region2: #{tpu_custom_call.1} parent=1 // pred_check
      _
    $region3: #{tpu_custom_call.1} parent=1 // pred_check_branch
      %12 = sbr.rel (0) target = $region5
    $region4: #{tpu_custom_call.1} parent=1 // pred_region
      %s14 = ssub.s32 128, 32
      %15 = vsyncadd [#allocation3], %s14
      %s16 = sshll.u32 [#allocation2], 4
      %s17 = int_to_ptr.vmem [resolvable:$true] %s16
      %22 = dma.hbm_to_vmem [thread:$0]  %s0, 32, %s17, [#allocation3], 32, 32, 2
    $region5: #{tpu_custom_call.1} parent=1 // pred_fallthru
      _
    // Predicated region
    $region6: #{tpu_custom_call.1} parent=1 // pred_check
      _
    $region7: #{tpu_custom_call.1} parent=1 // pred_check_branch
      %24 = sbr.rel (0) target = $region9
    $region8: #{tpu_custom_call.1} parent=1 // pred_region
      %s26 = ssub.s32 512, 512
      %27 = vsyncadd [#allocation6], %s26
      %s28 = sshll.u32 [#allocation5], 4
      %s29 = int_to_ptr.vmem [resolvable:$true] %s28
      %34 = dma.hbm_to_vmem [thread:$0]  %s1, 512, %s29, [#allocation6], 128, 128, 8
    $region9: #{tpu_custom_call.1} parent=1 // pred_fallthru
      _
    // Predicated region
    $region10: #{tpu_custom_call.1} parent=1 // pred_check
      _
    $region11: #{tpu_custom_call.1} parent=1 // pred_check_branch
      %36 = sbr.rel (0) target = $region13
    $region12: #{tpu_custom_call.1} parent=1 // pred_region
      _
    $region13: #{tpu_custom_call.1} parent=1 // pred_fallthru
      _
    // Predicated region
    $region14: #{tpu_custom_call.1} parent=1 // pred_check
      _
    $region15: #{tpu_custom_call.1} parent=1 // pred_check_branch
      %38 = sbr.rel (0) target = $region17
    $region16: #{tpu_custom_call.1} parent=1 // pred_region
      %39 = dma.done [#allocation3], 128
    $region17: #{tpu_custom_call.1} parent=1 // pred_fallthru
      _
    // Predicated region
    $region18: #{tpu_custom_call.1} parent=1 // pred_check
      _
    $region19: #{tpu_custom_call.1} parent=1 // pred_check_branch
      %41 = sbr.rel (0) target = $region21
    $region20: #{tpu_custom_call.1} parent=1 // pred_region
      %42 = dma.done [#allocation6], 512
    $region21: #{tpu_custom_call.1} parent=1 // pred_fallthru
      _
    %v43 = vld [vmem:[#allocation2] sm:$0xff]
    %v44 = vld [vmem:[#allocation5] sm:$0xff]
    %v45 = vld [vmem:[#allocation5 + $0x8] sm:$0xff]
    %v46 = vld [vmem:[#allocation5 + $0x10] sm:$0xff]
    %v47 = vld [vmem:[#allocation5 + $0x18] sm:$0xff]
    %v48 = vld [vmem:[%s2] sm:$0x1]
    %v50 = vlaneseq
    %v51 = vshrl.u32 %v50, 7
    %v52 = vsub.s32 0, %v51
    %v53 = vrot.slane %v48, %v52
    %vm55 = vcmask 261120
    %v57 = vsel %vm55, %v43, 0
    %59 = vmatprep.subr.mxu0 0.0
    %60 = vmatpush1.msra.mxu0 0.0
    %61 = vmatprep.subr.mxu0 0.0
    %62 = vmatpush1.msra.mxu0 0.0
    %63 = vmatprep.subr.mxu0 0.0
    %64 = vmatpush1.msra.mxu0 0.0
    %65 = vmatprep.subr.mxu0 0.0
    %66 = vmatpush1.msra.mxu0 0.0
    %67 = vmatprep.subr.mxu0 0.0
    %68 = vmatpush1.msra.mxu0 0.0
    %69 = vmatprep.subr.mxu0 0.0
    %70 = vmatpush1.msra.mxu0 0.0
    %71 = vmatprep.subr.mxu0 0.0
    %72 = vmatpush1.msra.mxu0 0.0
    %73 = vmatprep.subr.mxu0 0.0
    %74 = vmatpush1.msra.mxu0 0.0
    %75 = vmatprep.subr.mxu0 0.0
    %76 = vmatpush1.msra.mxu0 0.0
    %77 = vmatprep.subr.mxu0 0.0
    %78 = vmatpush1.msra.mxu0 0.0
    %79 = vmatprep.subr.mxu0 0.0
    %80 = vmatpush1.msra.mxu0 0.0
    %81 = vmatprep.subr.mxu0 0.0
    %82 = vmatpush1.msra.mxu0 0.0
    %83 = vmatprep.subr.mxu0 0.0
    %84 = vmatpush1.msra.mxu0 %v47
    %85 = vmatprep.subr.mxu0 0.0
    %86 = vmatpush1.msra.mxu0 %v46
    %87 = vmatprep.subr.mxu0 0.0
    %88 = vmatpush1.msra.mxu0 %v45
    %89 = vmatprep.subr.mxu0 0.0
    %90 = vmatpush1.msra.mxu0 %v44
    %91 = vmatprep.subr.mxu0 0.0
    %92 = vmatpush2.msra.mxu0 0.0
    %93 = vmatprep.subr.mxu0 0.0
    %94 = vmatpush2.msra.mxu0 0.0
    %95 = vmatprep.subr.mxu0 0.0
    %96 = vmatpush2.msra.mxu0 0.0
    %97 = vmatprep.subr.mxu0 0.0
    %98 = vmatpush2.msra.mxu0 0.0
    %99 = vmatprep.subr.mxu0 0.0
    %100 = vmatpush2.msra.mxu0 0.0
    %101 = vmatprep.subr.mxu0 0.0
    %102 = vmatpush2.msra.mxu0 0.0
    %103 = vmatprep.subr.mxu0 0.0
    %104 = vmatpush2.msra.mxu0 0.0
    %105 = vmatprep.subr.mxu0 0.0
    %106 = vmatpush2.msra.mxu0 0.0
    %107 = vmatprep.subr.mxu0 0.0
    %108 = vmatpush2.msra.mxu0 0.0
    %109 = vmatprep.subr.mxu0 0.0
    %110 = vmatpush2.msra.mxu0 0.0
    %111 = vmatprep.subr.mxu0 0.0
    %112 = vmatpush2.msra.mxu0 0.0
    %113 = vmatprep.subr.mxu0 0.0
    %114 = vmatpush2.msra.mxu0 0.0
    %115 = vmatprep.subr.mxu0 0.0
    %116 = vmatpush2.msra.mxu0 0.0
    %117 = vmatprep.subr.mxu0 0.0
    %118 = vmatpush2.msra.mxu0 0.0
    %119 = vmatprep.subr.mxu0 0.0
    %120 = vmatpush2.msra.mxu0 0.0
    %121 = vmatprep.subr.mxu0 0.0
    %122 = vmatpush2.msra.mxu0 0.0
    %123 = vmatprep.mubr.f32.mxu0 0.0
    %124 = vmatmul.mubr.f32.gmra.mxu0 %v57
    %v125 = vpop.f32.mrf.mxu0
    %v126 = vadd.f32 %v53, %v125
    %v127 = vpop.f32.mrf.mxu0
    %128 = vdwg.mxu0
    %vm129 = vcmp.ge.f32.partialorder %v126, 0.0
    %v130 = vmul.f32 %v126, 0.2
    %v131 = vsel %vm129, %v126, %v130
    %132 = vst [vmem:[#allocation7] sm:$0xff] %v131
    // Predicated region
    $region22: #{tpu_custom_call.1} parent=1 // pred_check
      _
    $region23: #{tpu_custom_call.1} parent=1 // pred_check_branch
      %134 = sbr.rel (0) target = $region25
    $region24: #{tpu_custom_call.1} parent=1 // pred_region
      %s136 = ssub.s32 128, 32
      %137 = vsyncadd [#allocation4], %s136
      %s138 = sshll.u32 [#allocation7], 4
      %s139 = int_to_ptr.vmem [resolvable:$true] %s138
      %144 = dma.vmem_to_hbm [thread:$0]  %s139, 32, %s3, [#allocation4], 32, 32, 2
    $region25: #{tpu_custom_call.1} parent=1 // pred_fallthru
      _
    // Predicated region
    $region26: #{tpu_custom_call.1} parent=1 // pred_check
      _
    $region27: #{tpu_custom_call.1} parent=1 // pred_check_branch
      %146 = sbr.rel (0) target = $region29
    $region28: #{tpu_custom_call.1} parent=1 // pred_region
      %147 = dma.done [#allocation4], 128
    $region29: #{tpu_custom_call.1} parent=1 // pred_fallthru
      _
    %148 = vsyncpa [#allocation3], 1
    %149 = vsyncpa [#allocation6], 1
    %150 = vsyncpa [#allocation4], 1

</llo_original>
